<compile_context>
chip_gen: v6e
topology: v6e:2x2x1
jax: 0.10.0
libtpu: 0.0.40
codegen_flags: <defaults>
</compile_context>

<pallas_src>
import functools

import jax
import jax.numpy as jnp
from jax.experimental import pallas as pl
from jax.experimental.pallas import tpu as pltpu

IN_DIM = 784
H1, H2 = 256, 128
H3_PAD = 128          # fc3 outputs padded 64 -> 128 lanes (zero weights/bias)
OUT_PAD = 128         # fc4 outputs padded 10 -> 128 lanes
NUM_CLASSES = 10
NEG_BIG = -1e30       # padded-logit bias (finite in f32 AND bf16)


def _mlp_kernel(x_ref,
                w1_ref, b1_ref,
                w2_ref, b2_ref,
                w3_ref, b3_ref,
                w4_ref, b4_ref,
                o_ref):
    """Fused 4-layer MLP + ReLU + log_softmax for one (TB, 784) batch tile.

    Matmul operands are bf16 (f32 accumulation); all elementwise work is f32.
    """
    # Input arrives f32 straight from HBM; cast to bf16 here (VPU op hidden
    # under the MXU) instead of materializing a bf16 copy of x in HBM.
    x = x_ref[...].astype(jnp.bfloat16)                               # (TB, 784)

    # fc1 + ReLU   (dropout is identity in eval mode)
    h = jnp.dot(x, w1_ref[...], preferred_element_type=jnp.float32) + b1_ref[...]
    h = jnp.maximum(h, 0.0)

    # fc2 + ReLU
    h = jnp.dot(h.astype(jnp.bfloat16), w2_ref[...],
                preferred_element_type=jnp.float32) + b2_ref[...]
    h = jnp.maximum(h, 0.0)

    # fc3 + ReLU (padded to 128 lanes: zero weight cols / zero bias -> ReLU(0)=0)
    h = jnp.dot(h.astype(jnp.bfloat16), w3_ref[...],
                preferred_element_type=jnp.float32) + b3_ref[...]
    h = jnp.maximum(h, 0.0)

    # fc4 (logits padded to 128 lanes; padded columns get bias ~ -1e30)
    logits = jnp.dot(h.astype(jnp.bfloat16), w4_ref[...],
                     preferred_element_type=jnp.float32) + b4_ref[...]

    # Numerically stable log_softmax over features.  Padded columns never win
    # the max and contribute exp(-huge) == 0 to the sum.
    m = jnp.max(logits, axis=-1, keepdims=True)
    shifted = logits - m
    lse = jnp.log(jnp.sum(jnp.exp(shifted), axis=-1, keepdims=True))
    o_ref[...] = (shifted - lse).astype(o_ref.dtype)                  # bf16 writeback


def prepare_params(params):
    """One-time parameter prep (hoisted out of the forward pass).

    PyTorch Linear weights are (out, in); transpose to (in, out), cast matmul
    operands to bf16, keep biases f32 (1, out).  fc3/fc4 are padded to
    lane-dense 128-wide shapes (zero weights; zero bias for fc3, -1e30 bias
    for fc4's fake logit columns).
    """
    (w1, b1), (w2, b2), (w3, b3), (w4, b4) = params

    w1t = w1.T.astype(jnp.bfloat16)                                   # (784, 256)
    w2t = w2.T.astype(jnp.bfloat16)                                   # (256, 128)

    # fc3: 64 -> 128 outputs.
    w3t = jnp.zeros((H2, H3_PAD), jnp.float32)
    w3t = w3t.at[:, :64].set(w3.T).astype(jnp.bfloat16)               # (128, 128)
    b3r = jnp.zeros((1, H3_PAD), jnp.float32).at[:, :64].set(b3)      # (1, 128)

    # fc4: K 64 -> 128 (zero rows), out 10 -> 128 (zero cols, -1e30 bias).
    w4t = jnp.zeros((H3_PAD, OUT_PAD), jnp.float32)
    w4t = w4t.at[:64, :NUM_CLASSES].set(w4.T).astype(jnp.bfloat16)    # (128, 128)
    b4r = jnp.full((1, OUT_PAD), NEG_BIG, jnp.float32)
    b4r = b4r.at[:, :NUM_CLASSES].set(b4.astype(jnp.float32))         # (1, 128)

    b1r = b1.reshape(1, -1).astype(jnp.float32)                       # (1, 256)
    b2r = b2.reshape(1, -1).astype(jnp.float32)                       # (1, 128)

    return (w1t, b1r, w2t, b2r, w3t, b3r, w4t, b4r)


@functools.partial(jax.jit, static_argnames=("block_batch",))
def net_forward(x, prepared_params, *, block_batch=1024):
    """x: (B, 1, 28, 28) or (B, 784).  Returns (B, 10) float32 log-probs."""
    B = x.shape[0]
    # x.view(B, -1); stays f32 (the bf16 cast happens inside the kernel).
    x2d = x.reshape(B, -1).astype(jnp.float32)
    assert x2d.shape[1] == IN_DIM

    w1t, b1r, w2t, b2r, w3t, b3r, w4t, b4r = prepared_params

    # Balanced tiles: pick the tile COUNT first, then round the tile size up
    # to a multiple of 8 sublanes -> padding is capped at 7 rows per tile.
    n_tiles = pl.cdiv(B, block_batch)
    if B >= 1024 and n_tiles % 2 == 1:
        n_tiles += 1            # even tile count keeps both v7x TensorCores fed
    tb = 8 * pl.cdiv(B, 8 * n_tiles)
    b_pad = tb * n_tiles
    if b_pad != B:
        x2d = jnp.pad(x2d, ((0, b_pad - B), (0, 0)))

    grid = (b_pad // tb,)

    # Activations/outputs tile over the batch grid; weights & biases get a
    # constant index_map so they are fetched once and stay VMEM-resident.
    x_spec = pl.BlockSpec((tb, IN_DIM), lambda i: (i, 0))
    out_spec = pl.BlockSpec((tb, OUT_PAD), lambda i: (i, 0))
    resident = lambda shape: pl.BlockSpec(shape, lambda i: (0, 0))

    out = pl.pallas_call(
        _mlp_kernel,
        out_shape=jax.ShapeDtypeStruct((b_pad, OUT_PAD), jnp.bfloat16),
        grid=grid,
        in_specs=[
            x_spec,
            resident(w1t.shape), resident(b1r.shape),
            resident(w2t.shape), resident(b2r.shape),
            resident(w3t.shape), resident(b3r.shape),
            resident(w4t.shape), resident(b4r.shape),
        ],
        out_specs=out_spec,
        compiler_params=pltpu.CompilerParams(
            dimension_semantics=("parallel",),      # v7x: shard batch over 2 TCs
            vmem_limit_bytes=48 * 1024 * 1024,      # big tiles OK on v5e/v6e/v7x
        ),
    )(x2d, w1t, b1r, w2t, b2r, w3t, b3r, w4t, b4r)

    # Tiny (B, 10) slice; cast back to f32 to match the PyTorch reference dtype.
    return out[:B, :NUM_CLASSES].astype(jnp.float32)


def init_params(key):
    """Deterministic init mimicking PyTorch Linear default (U[-1/sqrt(fan_in), +])."""
    dims = [(784, 256), (256, 128), (128, 64), (64, 10)]
    params = []
    for (fan_in, fan_out) in dims:
        key, kw, kb = jax.random.split(key, 3)
        bound = 1.0 / jnp.sqrt(fan_in)
        w = jax.random.uniform(kw, (fan_out, fan_in), jnp.float32, -bound, bound)
        b = jax.random.uniform(kb, (fan_out,), jnp.float32, -bound, bound)
        params.append((w, b))
    return params


def _ref_forward(x, params):
    """Pure-JAX f32 reference of the PyTorch forward (eval mode)."""
    (w1, b1), (w2, b2), (w3, b3), (w4, b4) = params
    h = x.reshape(x.shape[0], -1)
    h = jnp.maximum(h @ w1.T + b1, 0.0)
    h = jnp.maximum(h @ w2.T + b2, 0.0)
    h = jnp.maximum(h @ w3.T + b3, 0.0)
    return jax.nn.log_softmax(h @ w4.T + b4, axis=1)


if __name__ == "__main__":
    key = jax.random.PRNGKey(0)
    kx, kx2, kp = jax.random.split(key, 3)

    params = init_params(kp)
    prepared = prepare_params(params)            # one-time prep (hoisted)

    # Small batch: single tile.
    B = 8
    x = jax.random.normal(kx, (B, 1, 28, 28), jnp.float32)   # NCHW MNIST-like input
    out = jax.block_until_ready(net_forward(x, prepared))
    assert out.shape == (B, NUM_CLASSES)
    # log_softmax rows should sum (in prob space) to ~1 (bf16 tolerance).
    assert jnp.allclose(jnp.sum(jnp.exp(out), axis=1), 1.0, atol=5e-2)
    ref = _ref_forward(x, params)
    assert float(jnp.max(jnp.abs(out - ref))) < 0.2, "mismatch vs f32 reference"

    # Larger batch exercising the balanced-tile / padding path (3 tiles of 104).
    B2 = 300
    x2 = jax.random.normal(kx2, (B2, IN_DIM), jnp.float32)
    out2 = jax.block_until_ready(net_forward(x2, prepared, block_batch=128))
    assert out2.shape == (B2, NUM_CLASSES)
    ref2 = _ref_forward(x2, params)
    assert float(jnp.max(jnp.abs(out2 - ref2))) < 0.2, "mismatch vs f32 reference"

    # TODO(synk): dropout (p=0.2) is identity in eval mode; add a
    # pltpu.prng_seed/prng_random_bits mask if training parity is ever needed.
    print("KERNEL_OK")
</pallas_src>

<mosaic_0001>
module attributes {stable_mosaic.version = 11 : i64} {
  func.func @_mlp_kernel(%arg0: i32, %arg1: memref<8x784xf32, #tpu.memory_space<vmem>>, %arg2: memref<784x256xbf16, #tpu.memory_space<vmem>>, %arg3: memref<1x256xf32, #tpu.memory_space<vmem>>, %arg4: memref<256x128xbf16, #tpu.memory_space<vmem>>, %arg5: memref<1x128xf32, #tpu.memory_space<vmem>>, %arg6: memref<128x128xbf16, #tpu.memory_space<vmem>>, %arg7: memref<1x128xf32, #tpu.memory_space<vmem>>, %arg8: memref<128x128xbf16, #tpu.memory_space<vmem>>, %arg9: memref<1x128xf32, #tpu.memory_space<vmem>>, %arg10: memref<8x128xbf16, #tpu.memory_space<vmem>>) attributes {dimension_semantics = [#tpu.dimension_semantics<parallel>], iteration_bounds = array<i64: 1>, scalar_prefetch = 0 : i64, scratch_operands = 0 : i64, tpu.core_type = #tpu.core_type<tc>, window_params = [{transform_indices = @transform_0, window_bounds = array<i64: 8, 784>}, {pipeline_mode = #tpu.pipeline_mode<synchronous>, transform_indices = @transform_1, window_bounds = array<i64: 784, 256>}, {pipeline_mode = #tpu.pipeline_mode<synchronous>, transform_indices = @transform_2, window_bounds = array<i64: 1, 256>}, {pipeline_mode = #tpu.pipeline_mode<synchronous>, transform_indices = @transform_3, window_bounds = array<i64: 256, 128>}, {pipeline_mode = #tpu.pipeline_mode<synchronous>, transform_indices = @transform_4, window_bounds = array<i64: 1, 128>}, {pipeline_mode = #tpu.pipeline_mode<synchronous>, transform_indices = @transform_5, window_bounds = array<i64: 128, 128>}, {pipeline_mode = #tpu.pipeline_mode<synchronous>, transform_indices = @transform_6, window_bounds = array<i64: 1, 128>}, {pipeline_mode = #tpu.pipeline_mode<synchronous>, transform_indices = @transform_7, window_bounds = array<i64: 128, 128>}, {pipeline_mode = #tpu.pipeline_mode<synchronous>, transform_indices = @transform_8, window_bounds = array<i64: 1, 128>}, {transform_indices = @transform_9, window_bounds = array<i64: 8, 128>}]} {
    %c0 = arith.constant 0 : index
    %c0_0 = arith.constant 0 : index
    %0 = vector.load %arg1[%c0, %c0_0] : memref<8x784xf32, #tpu.memory_space<vmem>>, vector<8x784xf32>
    %1 = arith.truncf %0 : vector<8x784xf32> to vector<8x784xbf16>
    %c0_1 = arith.constant 0 : index
    %c0_2 = arith.constant 0 : index
    %2 = vector.load %arg2[%c0_1, %c0_2] : memref<784x256xbf16, #tpu.memory_space<vmem>>, vector<784x256xbf16>
    %cst = arith.constant dense<0.000000e+00> : vector<8x256xf32>
    %3 = tpu.matmul %1, %2, %cst {dimension_numbers = #tpu.dot_dimension_numbers<[1], [0], [0], [1], [0, 0, 1, 1], [], []>} : vector<8x784xbf16>, vector<784x256xbf16>, vector<8x256xf32> -> vector<8x256xf32>
    %c0_3 = arith.constant 0 : index
    %c0_4 = arith.constant 0 : index
    %4 = vector.load %arg3[%c0_3, %c0_4] : memref<1x256xf32, #tpu.memory_space<vmem>>, vector<1x256xf32>
    %5 = vector.broadcast %4 : vector<1x256xf32> to vector<8x256xf32>
    %6 = arith.addf %3, %5 : vector<8x256xf32>
    %cst_5 = arith.constant 0.000000e+00 : f32
    %7 = vector.broadcast %cst_5 : f32 to vector<8x256xf32>
    %8 = arith.maximumf %6, %7 : vector<8x256xf32>
    %9 = arith.truncf %8 : vector<8x256xf32> to vector<8x256xbf16>
    %c0_6 = arith.constant 0 : index
    %c0_7 = arith.constant 0 : index
    %10 = vector.load %arg4[%c0_6, %c0_7] : memref<256x128xbf16, #tpu.memory_space<vmem>>, vector<256x128xbf16>
    %cst_8 = arith.constant dense<0.000000e+00> : vector<8x128xf32>
    %11 = tpu.matmul %9, %10, %cst_8 {dimension_numbers = #tpu.dot_dimension_numbers<[1], [0], [0], [1], [0, 0, 1, 1], [], []>} : vector<8x256xbf16>, vector<256x128xbf16>, vector<8x128xf32> -> vector<8x128xf32>
    %c0_9 = arith.constant 0 : index
    %c0_10 = arith.constant 0 : index
    %12 = vector.load %arg5[%c0_9, %c0_10] : memref<1x128xf32, #tpu.memory_space<vmem>>, vector<1x128xf32>
    %13 = vector.broadcast %12 : vector<1x128xf32> to vector<8x128xf32>
    %14 = arith.addf %11, %13 : vector<8x128xf32>
    %cst_11 = arith.constant 0.000000e+00 : f32
    %15 = vector.broadcast %cst_11 : f32 to vector<8x128xf32>
    %16 = arith.maximumf %14, %15 : vector<8x128xf32>
    %17 = arith.truncf %16 : vector<8x128xf32> to vector<8x128xbf16>
    %c0_12 = arith.constant 0 : index
    %c0_13 = arith.constant 0 : index
    %18 = vector.load %arg6[%c0_12, %c0_13] : memref<128x128xbf16, #tpu.memory_space<vmem>>, vector<128x128xbf16>
    %cst_14 = arith.constant dense<0.000000e+00> : vector<8x128xf32>
    %19 = tpu.matmul %17, %18, %cst_14 {dimension_numbers = #tpu.dot_dimension_numbers<[1], [0], [0], [1], [0, 0, 1, 1], [], []>} : vector<8x128xbf16>, vector<128x128xbf16>, vector<8x128xf32> -> vector<8x128xf32>
    %c0_15 = arith.constant 0 : index
    %c0_16 = arith.constant 0 : index
    %20 = vector.load %arg7[%c0_15, %c0_16] : memref<1x128xf32, #tpu.memory_space<vmem>>, vector<1x128xf32>
    %21 = vector.broadcast %20 : vector<1x128xf32> to vector<8x128xf32>
    %22 = arith.addf %19, %21 : vector<8x128xf32>
    %cst_17 = arith.constant 0.000000e+00 : f32
    %23 = vector.broadcast %cst_17 : f32 to vector<8x128xf32>
    %24 = arith.maximumf %22, %23 : vector<8x128xf32>
    %25 = arith.truncf %24 : vector<8x128xf32> to vector<8x128xbf16>
    %c0_18 = arith.constant 0 : index
    %c0_19 = arith.constant 0 : index
    %26 = vector.load %arg8[%c0_18, %c0_19] : memref<128x128xbf16, #tpu.memory_space<vmem>>, vector<128x128xbf16>
    %cst_20 = arith.constant dense<0.000000e+00> : vector<8x128xf32>
    %27 = tpu.matmul %25, %26, %cst_20 {dimension_numbers = #tpu.dot_dimension_numbers<[1], [0], [0], [1], [0, 0, 1, 1], [], []>} : vector<8x128xbf16>, vector<128x128xbf16>, vector<8x128xf32> -> vector<8x128xf32>
    %c0_21 = arith.constant 0 : index
    %c0_22 = arith.constant 0 : index
    %28 = vector.load %arg9[%c0_21, %c0_22] : memref<1x128xf32, #tpu.memory_space<vmem>>, vector<1x128xf32>
    %29 = vector.broadcast %28 : vector<1x128xf32> to vector<8x128xf32>
    %30 = arith.addf %27, %29 : vector<8x128xf32>
    %cst_23 = arith.constant dense<0xFF800000> : vector<8xf32>
    %31 = vector.multi_reduction <maximumf>, %30, %cst_23 [1] : vector<8x128xf32> to vector<8xf32>
    %32 = vector.shape_cast %31 : vector<8xf32> to vector<8x1xf32>
    %33 = vector.broadcast %32 : vector<8x1xf32> to vector<8x128xf32>
    %34 = arith.subf %30, %33 : vector<8x128xf32>
    %35 = math.exp %34 : vector<8x128xf32>
    %cst_24 = arith.constant dense<0.000000e+00> : vector<8xf32>
    %36 = vector.multi_reduction <add>, %35, %cst_24 [1] : vector<8x128xf32> to vector<8xf32>
    %37 = vector.shape_cast %36 : vector<8xf32> to vector<8x1xf32>
    %38 = math.log %37 : vector<8x1xf32>
    %39 = vector.broadcast %38 : vector<8x1xf32> to vector<8x128xf32>
    %40 = arith.subf %34, %39 : vector<8x128xf32>
    %41 = arith.truncf %40 : vector<8x128xf32> to vector<8x128xbf16>
    %c0_25 = arith.constant 0 : index
    %c0_26 = arith.constant 0 : index
    %42 = vector.load %arg10[%c0_25, %c0_26] : memref<8x128xbf16, #tpu.memory_space<vmem>>, vector<8x128xbf16>
    tpu.vector_store %arg10[%c0_25, %c0_26], %41 {strides = array<i32>} : memref<8x128xbf16, #tpu.memory_space<vmem>>, vector<8x128xbf16>,
    return
  }
  func.func @transform_0(%arg0: i32) -> (i32, i32) {
    %c0_i32 = arith.constant 0 : i32
    %c0_i32_0 = arith.constant 0 : i32
    return %arg0, %c0_i32 : i32, i32
  }
  func.func @transform_1(%arg0: i32) -> (i32, i32) {
    %c0_i32 = arith.constant 0 : i32
    %c0_i32_0 = arith.constant 0 : i32
    %c0_i32_1 = arith.constant 0 : i32
    return %c0_i32, %c0_i32_0 : i32, i32
  }
  func.func @transform_2(%arg0: i32) -> (i32, i32) {
    %c0_i32 = arith.constant 0 : i32
    %c0_i32_0 = arith.constant 0 : i32
    %c0_i32_1 = arith.constant 0 : i32
    return %c0_i32, %c0_i32_0 : i32, i32
  }
  func.func @transform_3(%arg0: i32) -> (i32, i32) {
    %c0_i32 = arith.constant 0 : i32
    %c0_i32_0 = arith.constant 0 : i32
    %c0_i32_1 = arith.constant 0 : i32
    return %c0_i32, %c0_i32_0 : i32, i32
  }
  func.func @transform_4(%arg0: i32) -> (i32, i32) {
    %c0_i32 = arith.constant 0 : i32
    %c0_i32_0 = arith.constant 0 : i32
    %c0_i32_1 = arith.constant 0 : i32
    return %c0_i32, %c0_i32_0 : i32, i32
  }
  func.func @transform_5(%arg0: i32) -> (i32, i32) {
    %c0_i32 = arith.constant 0 : i32
    %c0_i32_0 = arith.constant 0 : i32
    %c0_i32_1 = arith.constant 0 : i32
    return %c0_i32, %c0_i32_0 : i32, i32
  }
  func.func @transform_6(%arg0: i32) -> (i32, i32) {
    %c0_i32 = arith.constant 0 : i32
    %c0_i32_0 = arith.constant 0 : i32
    %c0_i32_1 = arith.constant 0 : i32
    return %c0_i32, %c0_i32_0 : i32, i32
  }
  func.func @transform_7(%arg0: i32) -> (i32, i32) {
    %c0_i32 = arith.constant 0 : i32
    %c0_i32_0 = arith.constant 0 : i32
    %c0_i32_1 = arith.constant 0 : i32
    return %c0_i32, %c0_i32_0 : i32, i32
  }
  func.func @transform_8(%arg0: i32) -> (i32, i32) {
    %c0_i32 = arith.constant 0 : i32
    %c0_i32_0 = arith.constant 0 : i32
    %c0_i32_1 = arith.constant 0 : i32
    return %c0_i32, %c0_i32_0 : i32, i32
  }
  func.func @transform_9(%arg0: i32) -> (i32, i32) {
    %c0_i32 = arith.constant 0 : i32
    %c0_i32_0 = arith.constant 0 : i32
    return %arg0, %c0_i32 : i32, i32
  }
}

</mosaic_0001>

<llo_original>
// kernel: net_forward.1
$region0: #{net_forward.1}
  #allocation0 [shape = 'u32[]', space=smem, size = 0x4, offset = 0x4, fixed_abs, tag = 'smem constant byte address 0x4 - core index']
  #allocation1 [shape = 'u32[144,128]{1,0:T(1,128)}', space=vmem, size = 0x12000, scoped, tag = 'internal scratch']
  %s0 = inlined_call_operand.vmem [shape: f32[8,784], index: 0, kind: input, shape index: {}]
  %s1 = inlined_call_operand.vmem [shape: bf16[784,256], index: 1, kind: input, shape index: {}]
  %s2 = inlined_call_operand.vmem [shape: f32[1,256], index: 2, kind: input, shape index: {}]
  %s3 = inlined_call_operand.hbm [shape: bf16[256,128], index: 3, kind: input, shape index: {}]
  %s4 = inlined_call_operand.vmem [shape: f32[1,128], index: 4, kind: input, shape index: {}]
  %s5 = inlined_call_operand.hbm [shape: bf16[128,128], index: 5, kind: input, shape index: {}]
  %s6 = inlined_call_operand.vmem [shape: f32[1,128], index: 6, kind: input, shape index: {}]
  %s7 = inlined_call_operand.hbm [shape: bf16[128,128], index: 7, kind: input, shape index: {}]
  %s8 = inlined_call_operand.vmem [shape: f32[1,128], index: 8, kind: input, shape index: {}]
  %s9 = inlined_call_operand.vmem [shape: bf16[8,128], index: 9, kind: output, shape index: {}]
  %s10 = sld [smem:[#allocation0]]
  $region58: #{net_forward.1} parent=0
    _
  %s12 = ssub.s32 1, %s10
  %s13 = scalar_select 0, %s12, %s10
  $region1: #{net_forward.1} parent=0
    #allocation2 [shape = 'u8[65536]{0}', space=vmem, size = 0x10000, scoped, tag = 'input window, operand 3, single buffered']
    #allocation3 [shape = 's32[1]{0}', space=sflag, size = 0x4, scoped, tag = 'scoped memory for net_forward.1']
    #allocation4 [shape = 'u8[32768]{0}', space=vmem, size = 0x8000, scoped, tag = 'input window, operand 5, single buffered']
    #allocation5 [shape = 's32[1]{0}', space=sflag, size = 0x4, scoped, tag = 'scoped memory for net_forward.1']
    #allocation6 [shape = 'u8[32768]{0}', space=vmem, size = 0x8000, scoped, tag = 'input window, operand 7, single buffered']
    %14 = vsyncpa [#allocation3], 0
    %15 = vsyncpa [#allocation5], 0
    // Predicated region
    $region2: #{net_forward.1} parent=1 // pred_check
      _
    $region3: #{net_forward.1} parent=1 // pred_check_branch
      %17 = sbr.rel (0) target = $region5
    $region4: #{net_forward.1} parent=1 // pred_region
      _
    $region5: #{net_forward.1} parent=1 // pred_fallthru
      _
    // Predicated region
    $region6: #{net_forward.1} parent=1 // pred_check
      _
    $region7: #{net_forward.1} parent=1 // pred_check_branch
      %19 = sbr.rel (0) target = $region9
    $region8: #{net_forward.1} parent=1 // pred_region
      _
    $region9: #{net_forward.1} parent=1 // pred_fallthru
      _
    // Predicated region
    $region10: #{net_forward.1} parent=1 // pred_check
      _
    $region11: #{net_forward.1} parent=1 // pred_check_branch
      %21 = sbr.rel (0) target = $region13
    $region12: #{net_forward.1} parent=1 // pred_region
      _
    $region13: #{net_forward.1} parent=1 // pred_fallthru
      _
    // Predicated region
    $region14: #{net_forward.1} parent=1 // pred_check
      _
    $region15: #{net_forward.1} parent=1 // pred_check_branch
      %23 = sbr.rel (0) target = $region17
    $region16: #{net_forward.1} parent=1 // pred_region
      %s25 = ssub.s32 2048, 2048
      %26 = vsyncadd [#allocation3], %s25
      %s27 = sshll.u32 [#allocation2], 4
      %s28 = int_to_ptr.vmem [resolvable:$true] %s27
      %33 = dma.hbm_to_vmem [thread:$0]  %s3, 2048, %s28, [#allocation3], 64, 64, 4
    $region17: #{net_forward.1} parent=1 // pred_fallthru
      _
    // Predicated region
    $region18: #{net_forward.1} parent=1 // pred_check
      _
    $region19: #{net_forward.1} parent=1 // pred_check_branch
      %35 = sbr.rel (0) target = $region21
    $region20: #{net_forward.1} parent=1 // pred_region
      _
    $region21: #{net_forward.1} parent=1 // pred_fallthru
      _
    // Predicated region
    $region22: #{net_forward.1} parent=1 // pred_check
      _
    $region23: #{net_forward.1} parent=1 // pred_check_branch
      %37 = sbr.rel (0) target = $region25
    $region24: #{net_forward.1} parent=1 // pred_region
      %s39 = ssub.s32 1024, 1024
      %40 = vsyncadd [#allocation5], %s39
      %s41 = sshll.u32 [#allocation4], 4
      %s42 = int_to_ptr.vmem [resolvable:$true] %s41
      %47 = dma.hbm_to_vmem [thread:$0]  %s5, 1024, %s42, [#allocation5], 64, 64, 4
    $region25: #{net_forward.1} parent=1 // pred_fallthru
      _
    // Predicated region
    $region26: #{net_forward.1} parent=1 // pred_check
      _
    $region27: #{net_forward.1} parent=1 // pred_check_branch
      %49 = sbr.rel (0) target = $region29
    $region28: #{net_forward.1} parent=1 // pred_region
      _
    $region29: #{net_forward.1} parent=1 // pred_fallthru
      _
    // Predicated region
    $region30: #{net_forward.1} parent=1 // pred_check
      _
    $region31: #{net_forward.1} parent=1 // pred_check_branch
      %51 = sbr.rel (0) target = $region33
    $region32: #{net_forward.1} parent=1 // pred_region
      %s53 = ssub.s32 1024, 1024
      %54 = vsyncadd [#allocation5], %s53
      %s55 = sshll.u32 [#allocation6], 4
      %s56 = int_to_ptr.vmem [resolvable:$true] %s55
      %61 = dma.hbm_to_vmem [thread:$0]  %s7, 1024, %s56, [#allocation5], 64, 64, 4
    $region33: #{net_forward.1} parent=1 // pred_fallthru
      _
    // Predicated region
    $region34: #{net_forward.1} parent=1 // pred_check
      _
    $region35: #{net_forward.1} parent=1 // pred_check_branch
      %63 = sbr.rel (0) target = $region37
    $region36: #{net_forward.1} parent=1 // pred_region
      _
    $region37: #{net_forward.1} parent=1 // pred_fallthru
      _
    // Predicated region
    $region38: #{net_forward.1} parent=1 // pred_check
      _
    $region39: #{net_forward.1} parent=1 // pred_check_branch
      %65 = sbr.rel (0) target = $region41
    $region40: #{net_forward.1} parent=1 // pred_region
      %66 = dma.done [#allocation3], 2048
    $region41: #{net_forward.1} parent=1 // pred_fallthru
      _
    // Predicated region
    $region42: #{net_forward.1} parent=1 // pred_check
      _
    $region43: #{net_forward.1} parent=1 // pred_check_branch
      %68 = sbr.rel (0) target = $region45
    $region44: #{net_forward.1} parent=1 // pred_region
      %69 = dma.done [#allocation5], 1024
    $region45: #{net_forward.1} parent=1 // pred_fallthru
      _
    // Predicated region
    $region46: #{net_forward.1} parent=1 // pred_check
      _
    $region47: #{net_forward.1} parent=1 // pred_check_branch
      %71 = sbr.rel (0) target = $region49
    $region48: #{net_forward.1} parent=1 // pred_region
      %72 = dma.done [#allocation5], 1024
    $region49: #{net_forward.1} parent=1 // pred_fallthru
      _
    %v74 = vld [vmem:[%s0] sm:$0xff]
    %v75 = vld [vmem:[%s0 + $0x8] sm:$0xff]
    %v76 = vld [vmem:[%s0 + $0x10] sm:$0xff]
    %v77 = vld [vmem:[%s0 + $0x18] sm:$0xff]
    %v78 = vld [vmem:[%s0 + $0x20] sm:$0xff]
    %v79 = vld [vmem:[%s0 + $0x28] sm:$0xff]
    %v80 = vld [vmem:[%s0 + $0x30] sm:$0xff]
    %v81 = vpack.c.bf16 %v74, %v74
    %v82 = vpack.c.bf16 %v75, %v75
    %v83 = vpack.c.bf16 %v76, %v76
    %v84 = vpack.c.bf16 %v77, %v77
    %v85 = vpack.c.bf16 %v78, %v78
    %v86 = vpack.c.bf16 %v79, %v79
    %v87 = vpack.c.bf16 %v80, %v80
    %v88 = vld [vmem:[%s1] sm:$0xff]
    %v89 = vld [vmem:[%s1 + $0x8] sm:$0xff]
    %v90 = vld [vmem:[%s1 + $0x10] sm:$0xff]
    %v91 = vld [vmem:[%s1 + $0x18] sm:$0xff]
    %v92 = vld [vmem:[%s1 + $0x20] sm:$0xff]
    %v93 = vld [vmem:[%s1 + $0x28] sm:$0xff]
    %v94 = vld [vmem:[%s1 + $0x30] sm:$0xff]
    %v95 = vld [vmem:[%s1 + $0x38] sm:$0xff]
    %v96 = vld [vmem:[%s1 + $0x40] sm:$0xff]
    %v97 = vld [vmem:[%s1 + $0x48] sm:$0xff]
    %v98 = vld [vmem:[%s1 + $0x50] sm:$0xff]
    %v99 = vld [vmem:[%s1 + $0x58] sm:$0xff]
    %v100 = vld [vmem:[%s1 + $0x60] sm:$0xff]
    %v101 = vld [vmem:[%s1 + $0x68] sm:$0xff]
    %v102 = vld [vmem:[%s1 + $0x70] sm:$0xff]
    %v103 = vld [vmem:[%s1 + $0x78] sm:$0xff]
    %v104 = vld [vmem:[%s1 + $0x80] sm:$0xff]
    %v105 = vld [vmem:[%s1 + $0x88] sm:$0xff]
    %v106 = vld [vmem:[%s1 + $0x90] sm:$0xff]
    %v107 = vld [vmem:[%s1 + $0x98] sm:$0xff]
    %v108 = vld [vmem:[%s1 + $0xa0] sm:$0xff]
    %v109 = vld [vmem:[%s1 + $0xa8] sm:$0xff]
    %v110 = vld [vmem:[%s1 + $0xb0] sm:$0xff]
    %v111 = vld [vmem:[%s1 + $0xb8] sm:$0xff]
    %v112 = vld [vmem:[%s1 + $0xc0] sm:$0xff]
    %v113 = vld [vmem:[%s1 + $0xc8] sm:$0xff]
    %v114 = vld [vmem:[%s1 + $0xd0] sm:$0xff]
    %v115 = vld [vmem:[%s1 + $0xd8] sm:$0xff]
    %v116 = vld [vmem:[%s1 + $0xe0] sm:$0xff]
    %v117 = vld [vmem:[%s1 + $0xe8] sm:$0xff]
    %v118 = vld [vmem:[%s1 + $0xf0] sm:$0xff]
    %v119 = vld [vmem:[%s1 + $0xf8] sm:$0xff]
    %v120 = vld [vmem:[%s1 + $0x100] sm:$0xff]
    %v121 = vld [vmem:[%s1 + $0x108] sm:$0xff]
    %v122 = vld [vmem:[%s1 + $0x110] sm:$0xff]
    %v123 = vld [vmem:[%s1 + $0x118] sm:$0xff]
    %v124 = vld [vmem:[%s1 + $0x120] sm:$0xff]
    %v125 = vld [vmem:[%s1 + $0x128] sm:$0xff]
    %v126 = vld [vmem:[%s1 + $0x130] sm:$0xff]
    %v127 = vld [vmem:[%s1 + $0x138] sm:$0xff]
    %v128 = vld [vmem:[%s1 + $0x140] sm:$0xff]
    %v129 = vld [vmem:[%s1 + $0x148] sm:$0xff]
    %v130 = vld [vmem:[%s1 + $0x150] sm:$0xff]
    %v131 = vld [vmem:[%s1 + $0x158] sm:$0xff]
    %v132 = vld [vmem:[%s1 + $0x160] sm:$0xff]
    %v133 = vld [vmem:[%s1 + $0x168] sm:$0xff]
    %v134 = vld [vmem:[%s1 + $0x170] sm:$0xff]
    %v135 = vld [vmem:[%s1 + $0x178] sm:$0xff]
    %v136 = vld [vmem:[%s1 + $0x180] sm:$0xff]
    %v137 = vld [vmem:[%s1 + $0x188] sm:$0xff]
    %v138 = vld [vmem:[%s1 + $0x190] sm:$0xff]
    %v139 = vld [vmem:[%s1 + $0x198] sm:$0xff]
    %v140 = vld [vmem:[%s1 + $0x1a0] sm:$0xff]
    %v141 = vld [vmem:[%s1 + $0x1a8] sm:$0xff]
    %v142 = vld [vmem:[%s1 + $0x1b0] sm:$0xff]
    %v143 = vld [vmem:[%s1 + $0x1b8] sm:$0xff]
    %v144 = vld [vmem:[%s1 + $0x1c0] sm:$0xff]
    %v145 = vld [vmem:[%s1 + $0x1c8] sm:$0xff]
    %v146 = vld [vmem:[%s1 + $0x1d0] sm:$0xff]
    %v147 = vld [vmem:[%s1 + $0x1d8] sm:$0xff]
    %v148 = vld [vmem:[%s1 + $0x1e0] sm:$0xff]
    %v149 = vld [vmem:[%s1 + $0x1e8] sm:$0xff]
    %v150 = vld [vmem:[%s1 + $0x1f0] sm:$0xff]
    %v151 = vld [vmem:[%s1 + $0x1f8] sm:$0xff]
    %v152 = vld [vmem:[%s1 + $0x200] sm:$0xff]
    %v153 = vld [vmem:[%s1 + $0x208] sm:$0xff]
    %v154 = vld [vmem:[%s1 + $0x210] sm:$0xff]
    %v155 = vld [vmem:[%s1 + $0x218] sm:$0xff]
    %v156 = vld [vmem:[%s1 + $0x220] sm:$0xff]
    %v157 = vld [vmem:[%s1 + $0x228] sm:$0xff]
    %v158 = vld [vmem:[%s1 + $0x230] sm:$0xff]
    %v159 = vld [vmem:[%s1 + $0x238] sm:$0xff]
    %v160 = vld [vmem:[%s1 + $0x240] sm:$0xff]
    %v161 = vld [vmem:[%s1 + $0x248] sm:$0xff]
    %v162 = vld [vmem:[%s1 + $0x250] sm:$0xff]
    %v163 = vld [vmem:[%s1 + $0x258] sm:$0xff]
    %v164 = vld [vmem:[%s1 + $0x260] sm:$0xff]
    %v165 = vld [vmem:[%s1 + $0x268] sm:$0xff]
    %v166 = vld [vmem:[%s1 + $0x270] sm:$0xff]
    %v167 = vld [vmem:[%s1 + $0x278] sm:$0xff]
    %v168 = vld [vmem:[%s1 + $0x280] sm:$0xff]
    %v169 = vld [vmem:[%s1 + $0x288] sm:$0xff]
    %v170 = vld [vmem:[%s1 + $0x290] sm:$0xff]
    %v171 = vld [vmem:[%s1 + $0x298] sm:$0xff]
    %v172 = vld [vmem:[%s1 + $0x2a0] sm:$0xff]
    %v173 = vld [vmem:[%s1 + $0x2a8] sm:$0xff]
    %v174 = vld [vmem:[%s1 + $0x2b0] sm:$0xff]
    %v175 = vld [vmem:[%s1 + $0x2b8] sm:$0xff]
    %v176 = vld [vmem:[%s1 + $0x2c0] sm:$0xff]
    %v177 = vld [vmem:[%s1 + $0x2c8] sm:$0xff]
    %v178 = vld [vmem:[%s1 + $0x2d0] sm:$0xff]
    %v179 = vld [vmem:[%s1 + $0x2d8] sm:$0xff]
    %v180 = vld [vmem:[%s1 + $0x2e0] sm:$0xff]
    %v181 = vld [vmem:[%s1 + $0x2e8] sm:$0xff]
    %v182 = vld [vmem:[%s1 + $0x2f0] sm:$0xff]
    %v183 = vld [vmem:[%s1 + $0x2f8] sm:$0xff]
    %v184 = vld [vmem:[%s1 + $0x300] sm:$0xff]
    %v185 = vld [vmem:[%s1 + $0x308] sm:$0xff]
    %v186 = vld [vmem:[%s2] sm:$0x3]
    %v188 = vlaneseq
    %v189 = vshrl.u32 %v188, 7
    %v190 = vsub.s32 0, %v189
    %v191 = vrot.slane %v186, %v190
    %v192 = vlaneseq
    %v193 = vshrl.u32 %v192, 7
    %v194 = vsub.s32 1, %v193
    %v195 = vrot.slane %v186, %v194
    %v296 = vunpack.c.l.b16 %v88
    %v297 = vunpack.c.h.b16 %v88
    %v298 = vunpack.c.l.b16 %v89
    %v299 = vunpack.c.h.b16 %v89
    %v300 = vunpack.c.l.b16 %v90
    %v301 = vunpack.c.h.b16 %v90
    %v302 = vunpack.c.l.b16 %v91
    %v303 = vunpack.c.h.b16 %v91
    %v304 = vunpack.c.l.b16 %v92
    %v305 = vunpack.c.h.b16 %v92
    %v306 = vunpack.c.l.b16 %v93
    %v307 = vunpack.c.h.b16 %v93
    %v308 = vunpack.c.l.b16 %v94
    %v309 = vunpack.c.h.b16 %v94
    %v310 = vunpack.c.l.b16 %v95
    %v311 = vunpack.c.h.b16 %v95
    %v312 = vunpack.c.l.b16 %v96
    %v313 = vunpack.c.h.b16 %v96
    %v314 = vunpack.c.l.b16 %v97
    %v315 = vunpack.c.h.b16 %v97
    %v316 = vunpack.c.l.b16 %v98
    %v317 = vunpack.c.h.b16 %v98
    %v318 = vunpack.c.l.b16 %v99
    %v319 = vunpack.c.h.b16 %v99
    %v320 = vunpack.c.l.b16 %v100
    %v321 = vunpack.c.h.b16 %v100
    %v322 = vunpack.c.l.b16 %v101
    %v323 = vunpack.c.h.b16 %v101
    %v324 = vunpack.c.l.b16 %v102
    %v325 = vunpack.c.h.b16 %v102
    %v326 = vunpack.c.l.b16 %v103
    %v327 = vunpack.c.h.b16 %v103
    %v328 = vunpack.c.l.b16 %v104
    %v329 = vunpack.c.h.b16 %v104
    %v330 = vunpack.c.l.b16 %v105
    %v331 = vunpack.c.h.b16 %v105
    %v332 = vunpack.c.l.b16 %v106
    %v333 = vunpack.c.h.b16 %v106
    %v334 = vunpack.c.l.b16 %v107
    %v335 = vunpack.c.h.b16 %v107
    %v336 = vunpack.c.l.b16 %v108
    %v337 = vunpack.c.h.b16 %v108
    %v338 = vunpack.c.l.b16 %v109
    %v339 = vunpack.c.h.b16 %v109
    %v340 = vunpack.c.l.b16 %v110
    %v341 = vunpack.c.h.b16 %v110
    %v342 = vunpack.c.l.b16 %v111
    %v343 = vunpack.c.h.b16 %v111
    %v344 = vunpack.c.l.b16 %v112
    %v345 = vunpack.c.h.b16 %v112
    %v346 = vunpack.c.l.b16 %v113
    %v347 = vunpack.c.h.b16 %v113
    %v348 = vunpack.c.l.b16 %v114
    %v349 = vunpack.c.h.b16 %v114
    %v350 = vunpack.c.l.b16 %v115
    %v351 = vunpack.c.h.b16 %v115
    %v352 = vunpack.c.l.b16 %v116
    %v353 = vunpack.c.h.b16 %v116
    %v354 = vunpack.c.l.b16 %v117
    %v355 = vunpack.c.h.b16 %v117
    %v356 = vunpack.c.l.b16 %v118
    %v357 = vunpack.c.h.b16 %v118
    %v358 = vunpack.c.l.b16 %v119
    %v359 = vunpack.c.h.b16 %v119
    %v360 = vunpack.c.l.b16 %v120
    %v361 = vunpack.c.h.b16 %v120
    %v362 = vunpack.c.l.b16 %v121
    %v363 = vunpack.c.h.b16 %v121
    %v364 = vunpack.c.l.b16 %v122
    %v365 = vunpack.c.h.b16 %v122
    %v366 = vunpack.c.l.b16 %v123
    %v367 = vunpack.c.h.b16 %v123
    %v368 = vunpack.c.l.b16 %v124
    %v369 = vunpack.c.h.b16 %v124
    %v370 = vunpack.c.l.b16 %v125
    %v371 = vunpack.c.h.b16 %v125
    %v372 = vunpack.c.l.b16 %v126
    %v373 = vunpack.c.h.b16 %v126
    %v374 = vunpack.c.l.b16 %v127
    %v375 = vunpack.c.h.b16 %v127
    %v376 = vunpack.c.l.b16 %v128
    %v377 = vunpack.c.h.b16 %v128
    %v378 = vunpack.c.l.b16 %v129
    %v379 = vunpack.c.h.b16 %v129
    %v380 = vunpack.c.l.b16 %v130
    %v381 = vunpack.c.h.b16 %v130
    %v382 = vunpack.c.l.b16 %v131
    %v383 = vunpack.c.h.b16 %v131
    %v384 = vunpack.c.l.b16 %v132
    %v385 = vunpack.c.h.b16 %v132
    %v386 = vunpack.c.l.b16 %v133
    %v387 = vunpack.c.h.b16 %v133
    %v388 = vunpack.c.l.b16 %v134
    %v389 = vunpack.c.h.b16 %v134
    %v390 = vunpack.c.l.b16 %v135
    %v391 = vunpack.c.h.b16 %v135
    %v392 = vunpack.c.l.b16 %v136
    %v393 = vunpack.c.h.b16 %v136
    %v394 = vunpack.c.l.b16 %v137
    %v395 = vunpack.c.h.b16 %v137
    %v396 = vunpack.c.l.b16 %v138
    %v397 = vunpack.c.h.b16 %v138
    %v398 = vunpack.c.l.b16 %v139
    %v399 = vunpack.c.h.b16 %v139
    %v400 = vunpack.c.l.b16 %v140
    %v401 = vunpack.c.h.b16 %v140
    %v402 = vunpack.c.l.b16 %v141
    %v403 = vunpack.c.h.b16 %v141
    %v404 = vunpack.c.l.b16 %v142
    %v405 = vunpack.c.h.b16 %v142
    %v406 = vunpack.c.l.b16 %v143
    %v407 = vunpack.c.h.b16 %v143
    %v408 = vunpack.c.l.b16 %v144
    %v409 = vunpack.c.h.b16 %v144
    %v410 = vunpack.c.l.b16 %v145
    %v411 = vunpack.c.h.b16 %v145
    %v412 = vunpack.c.l.b16 %v146
    %v413 = vunpack.c.h.b16 %v146
    %v414 = vunpack.c.l.b16 %v147
    %v415 = vunpack.c.h.b16 %v147
    %v416 = vunpack.c.l.b16 %v148
    %v417 = vunpack.c.h.b16 %v148
    %v418 = vunpack.c.l.b16 %v149
    %v419 = vunpack.c.h.b16 %v149
    %v420 = vunpack.c.l.b16 %v150
    %v421 = vunpack.c.h.b16 %v150
    %v422 = vunpack.c.l.b16 %v151
    %v423 = vunpack.c.h.b16 %v151
    %v424 = vunpack.c.l.b16 %v152
    %v425 = vunpack.c.h.b16 %v152
    %v426 = vunpack.c.l.b16 %v153
    %v427 = vunpack.c.h.b16 %v153
    %v428 = vunpack.c.l.b16 %v154
    %v429 = vunpack.c.h.b16 %v154
    %v430 = vunpack.c.l.b16 %v155
    %v431 = vunpack.c.h.b16 %v155
    %v432 = vunpack.c.l.b16 %v156
    %v433 = vunpack.c.h.b16 %v156
    %v434 = vunpack.c.l.b16 %v157
    %v435 = vunpack.c.h.b16 %v157
    %v436 = vunpack.c.l.b16 %v158
    %v437 = vunpack.c.h.b16 %v158
    %v438 = vunpack.c.l.b16 %v159
    %v439 = vunpack.c.h.b16 %v159
    %v440 = vunpack.c.l.b16 %v160
    %v441 = vunpack.c.h.b16 %v160
    %v442 = vunpack.c.l.b16 %v161
    %v443 = vunpack.c.h.b16 %v161
    %v444 = vunpack.c.l.b16 %v162
    %v445 = vunpack.c.h.b16 %v162
    %v446 = vunpack.c.l.b16 %v163
    %v447 = vunpack.c.h.b16 %v163
    %v448 = vunpack.c.l.b16 %v164
    %v449 = vunpack.c.h.b16 %v164
    %v450 = vunpack.c.l.b16 %v165
    %v451 = vunpack.c.h.b16 %v165
    %v452 = vunpack.c.l.b16 %v166
    %v453 = vunpack.c.h.b16 %v166
    %v454 = vunpack.c.l.b16 %v167
    %v455 = vunpack.c.h.b16 %v167
    %v456 = vunpack.c.l.b16 %v168
    %v457 = vunpack.c.h.b16 %v168
    %v458 = vunpack.c.l.b16 %v169
    %v459 = vunpack.c.h.b16 %v169
    %v460 = vunpack.c.l.b16 %v170
    %v461 = vunpack.c.h.b16 %v170
    %v462 = vunpack.c.l.b16 %v171
    %v463 = vunpack.c.h.b16 %v171
    %v464 = vunpack.c.l.b16 %v172
    %v465 = vunpack.c.h.b16 %v172
    %v466 = vunpack.c.l.b16 %v173
    %v467 = vunpack.c.h.b16 %v173
    %v468 = vunpack.c.l.b16 %v174
    %v469 = vunpack.c.h.b16 %v174
    %v470 = vunpack.c.l.b16 %v175
    %v471 = vunpack.c.h.b16 %v175
    %v472 = vunpack.c.l.b16 %v176
    %v473 = vunpack.c.h.b16 %v176
    %v474 = vunpack.c.l.b16 %v177
    %v475 = vunpack.c.h.b16 %v177
    %v476 = vunpack.c.l.b16 %v178
    %v477 = vunpack.c.h.b16 %v178
    %v478 = vunpack.c.l.b16 %v179
    %v479 = vunpack.c.h.b16 %v179
    %v480 = vunpack.c.l.b16 %v180
    %v481 = vunpack.c.h.b16 %v180
    %v482 = vunpack.c.l.b16 %v181
    %v483 = vunpack.c.h.b16 %v181
    %v484 = vunpack.c.l.b16 %v182
    %v485 = vunpack.c.h.b16 %v182
    %v486 = vunpack.c.l.b16 %v183
    %v487 = vunpack.c.h.b16 %v183
    %v488 = vunpack.c.l.b16 %v184
    %v489 = vunpack.c.h.b16 %v184
    %v490 = vunpack.c.l.b16 %v185
    %v491 = vunpack.c.h.b16 %v185
    %v492 = vpack.c.b16 %v298, %v296
    %v493 = vpack.c.b16 %v299, %v297
    %v494 = vpack.c.b16 %v302, %v300
    %v495 = vpack.c.b16 %v303, %v301
    %v496 = vpack.c.b16 %v306, %v304
    %v497 = vpack.c.b16 %v307, %v305
    %v498 = vpack.c.b16 %v310, %v308
    %v499 = vpack.c.b16 %v311, %v309
    %v500 = vpack.c.b16 %v314, %v312
    %v501 = vpack.c.b16 %v315, %v313
    %v502 = vpack.c.b16 %v318, %v316
    %v503 = vpack.c.b16 %v319, %v317
    %v504 = vpack.c.b16 %v322, %v320
    %v505 = vpack.c.b16 %v323, %v321
    %v506 = vpack.c.b16 %v326, %v324
    %v507 = vpack.c.b16 %v327, %v325
    %v508 = vpack.c.b16 %v330, %v328
    %v509 = vpack.c.b16 %v331, %v329
    %v510 = vpack.c.b16 %v334, %v332
    %v511 = vpack.c.b16 %v335, %v333
    %v512 = vpack.c.b16 %v338, %v336
    %v513 = vpack.c.b16 %v339, %v337
    %v514 = vpack.c.b16 %v342, %v340
    %v515 = vpack.c.b16 %v343, %v341
    %v516 = vpack.c.b16 %v346, %v344
    %v517 = vpack.c.b16 %v347, %v345
    %v518 = vpack.c.b16 %v350, %v348
    %v519 = vpack.c.b16 %v351, %v349
    %v520 = vpack.c.b16 %v354, %v352
    %v521 = vpack.c.b16 %v355, %v353
    %v522 = vpack.c.b16 %v358, %v356
    %v523 = vpack.c.b16 %v359, %v357
    %v524 = vpack.c.b16 %v362, %v360
    %v525 = vpack.c.b16 %v363, %v361
    %v526 = vpack.c.b16 %v366, %v364
    %v527 = vpack.c.b16 %v367, %v365
    %v528 = vpack.c.b16 %v370, %v368
    %v529 = vpack.c.b16 %v371, %v369
    %v530 = vpack.c.b16 %v374, %v372
    %v531 = vpack.c.b16 %v375, %v373
    %v532 = vpack.c.b16 %v378, %v376
    %v533 = vpack.c.b16 %v379, %v377
    %v534 = vpack.c.b16 %v382, %v380
    %v535 = vpack.c.b16 %v383, %v381
    %v536 = vpack.c.b16 %v386, %v384
    %v537 = vpack.c.b16 %v387, %v385
    %v538 = vpack.c.b16 %v390, %v388
    %v539 = vpack.c.b16 %v391, %v389
    %v540 = vpack.c.b16 %v394, %v392
    %v541 = vpack.c.b16 %v395, %v393
    %v542 = vpack.c.b16 %v398, %v396
    %v543 = vpack.c.b16 %v399, %v397
    %v544 = vpack.c.b16 %v402, %v400
    %v545 = vpack.c.b16 %v403, %v401
    %v546 = vpack.c.b16 %v406, %v404
    %v547 = vpack.c.b16 %v407, %v405
    %v548 = vpack.c.b16 %v410, %v408
    %v549 = vpack.c.b16 %v411, %v409
    %v550 = vpack.c.b16 %v414, %v412
    %v551 = vpack.c.b16 %v415, %v413
    %v552 = vpack.c.b16 %v418, %v416
    %v553 = vpack.c.b16 %v419, %v417
    %v554 = vpack.c.b16 %v422, %v420
    %v555 = vpack.c.b16 %v423, %v421
    %v556 = vpack.c.b16 %v426, %v424
    %v557 = vpack.c.b16 %v427, %v425
    %v558 = vpack.c.b16 %v430, %v428
    %v559 = vpack.c.b16 %v431, %v429
    %v560 = vpack.c.b16 %v434, %v432
    %v561 = vpack.c.b16 %v435, %v433
    %v562 = vpack.c.b16 %v438, %v436
    %v563 = vpack.c.b16 %v439, %v437
    %v564 = vpack.c.b16 %v442, %v440
    %v565 = vpack.c.b16 %v443, %v441
    %v566 = vpack.c.b16 %v446, %v444
    %v567 = vpack.c.b16 %v447, %v445
    %v568 = vpack.c.b16 %v450, %v448
    %v569 = vpack.c.b16 %v451, %v449
    %v570 = vpack.c.b16 %v454, %v452
    %v571 = vpack.c.b16 %v455, %v453
    %v572 = vpack.c.b16 %v458, %v456
    %v573 = vpack.c.b16 %v459, %v457
    %v574 = vpack.c.b16 %v462, %v460
    %v575 = vpack.c.b16 %v463, %v461
    %v576 = vpack.c.b16 %v466, %v464
    %v577 = vpack.c.b16 %v467, %v465
    %v578 = vpack.c.b16 %v470, %v468
    %v579 = vpack.c.b16 %v471, %v469
    %v580 = vpack.c.b16 %v474, %v472
    %v581 = vpack.c.b16 %v475, %v473
    %v582 = vpack.c.b16 %v478, %v476
    %v583 = vpack.c.b16 %v479, %v477
    %v584 = vpack.c.b16 %v482, %v480
    %v585 = vpack.c.b16 %v483, %v481
    %v586 = vpack.c.b16 %v486, %v484
    %v587 = vpack.c.b16 %v487, %v485
    %v588 = vpack.c.b16 %v490, %v488
    %v589 = vpack.c.b16 %v491, %v489
    %vm688 = vcmask 130048
    %v690 = vsel %vm688, %v87, 0
    %692 = vmatprep.subr.bf16.mxu0 %v507
    %693 = vmatpush1.bf16.msra.mxu0 %v506
    %694 = vmatprep.subr.bf16.mxu0 %v505
    %695 = vmatpush1.bf16.msra.mxu0 %v504
    %696 = vmatprep.subr.bf16.mxu0 %v503
    %697 = vmatpush1.bf16.msra.mxu0 %v502
    %698 = vmatprep.subr.bf16.mxu0 %v501
    %699 = vmatpush1.bf16.msra.mxu0 %v500
    %700 = vmatprep.subr.bf16.mxu0 %v499
    %701 = vmatpush1.bf16.msra.mxu0 %v498
    %702 = vmatprep.subr.bf16.mxu0 %v497
    %703 = vmatpush1.bf16.msra.mxu0 %v496
    %704 = vmatprep.subr.bf16.mxu0 %v495
    %705 = vmatpush1.bf16.msra.mxu0 %v494
    %706 = vmatprep.subr.bf16.mxu0 %v493
    %707 = vmatpush1.bf16.msra.mxu0 %v492
    %708 = vmatprep.subr.bf16.mxu0 %v523
    %709 = vmatpush2.bf16.msra.mxu0 %v522
    %710 = vmatprep.subr.bf16.mxu0 %v521
    %711 = vmatpush2.bf16.msra.mxu0 %v520
    %712 = vmatprep.subr.bf16.mxu0 %v519
    %713 = vmatpush2.bf16.msra.mxu0 %v518
    %714 = vmatprep.subr.bf16.mxu0 %v517
    %715 = vmatpush2.bf16.msra.mxu0 %v516
    %716 = vmatprep.subr.bf16.mxu0 %v515
    %717 = vmatpush2.bf16.msra.mxu0 %v514
    %718 = vmatprep.subr.bf16.mxu0 %v513
    %719 = vmatpush2.bf16.msra.mxu0 %v512
    %720 = vmatprep.subr.bf16.mxu0 %v511
    %721 = vmatpush2.bf16.msra.mxu0 %v510
    %722 = vmatprep.subr.bf16.mxu0 %v509
    %723 = vmatpush2.bf16.msra.mxu0 %v508
    %724 = vmatprep.mubr.bf16.mxu0 %v82
    %725 = vmatmul.mubr.bf16.gmra.mxu0 %v81
    %v726 = vpop.f32.mrf.mxu0
    %v727 = vadd.f32 %v191, %v726
    %v728 = vpop.f32.mrf.mxu0
    %v729 = vadd.f32 %v195, %v728
    %v730 = vpop.f32.mrf.mxu0
    %v731 = vpop.f32.mrf.mxu0
    %732 = vdwg.mxu0
    %733 = vmatprep.subr.bf16.mxu0 %v539
    %734 = vmatpush1.bf16.msra.mxu0 %v538
    %735 = vmatprep.subr.bf16.mxu0 %v537
    %736 = vmatpush1.bf16.msra.mxu0 %v536
    %737 = vmatprep.subr.bf16.mxu0 %v535
    %738 = vmatpush1.bf16.msra.mxu0 %v534
    %739 = vmatprep.subr.bf16.mxu0 %v533
    %740 = vmatpush1.bf16.msra.mxu0 %v532
    %741 = vmatprep.subr.bf16.mxu0 %v531
    %742 = vmatpush1.bf16.msra.mxu0 %v530
    %743 = vmatprep.subr.bf16.mxu0 %v529
    %744 = vmatpush1.bf16.msra.mxu0 %v528
    %745 = vmatprep.subr.bf16.mxu0 %v527
    %746 = vmatpush1.bf16.msra.mxu0 %v526
    %747 = vmatprep.subr.bf16.mxu0 %v525
    %748 = vmatpush1.bf16.msra.mxu0 %v524
    %749 = vmatprep.subr.bf16.mxu0 %v555
    %750 = vmatpush2.bf16.msra.mxu0 %v554
    %751 = vmatprep.subr.bf16.mxu0 %v553
    %752 = vmatpush2.bf16.msra.mxu0 %v552
    %753 = vmatprep.subr.bf16.mxu0 %v551
    %754 = vmatpush2.bf16.msra.mxu0 %v550
    %755 = vmatprep.subr.bf16.mxu0 %v549
    %756 = vmatpush2.bf16.msra.mxu0 %v548
    %757 = vmatprep.subr.bf16.mxu0 %v547
    %758 = vmatpush2.bf16.msra.mxu0 %v546
    %759 = vmatprep.subr.bf16.mxu0 %v545
    %760 = vmatpush2.bf16.msra.mxu0 %v544
    %761 = vmatprep.subr.bf16.mxu0 %v543
    %762 = vmatpush2.bf16.msra.mxu0 %v542
    %763 = vmatprep.subr.bf16.mxu0 %v541
    %764 = vmatpush2.bf16.msra.mxu0 %v540
    %765 = vmatprep.mubr.bf16.mxu0 %v84
    %766 = vmatmul.mubr.bf16.gmra.mxu0 %v83
    %v767 = vpop.f32.mrf.mxu0
    %v768 = vadd.f32 %v727, %v767
    %v769 = vpop.f32.mrf.mxu0
    %v770 = vadd.f32 %v729, %v769
    %v771 = vpop.f32.mrf.mxu0
    %v772 = vpop.f32.mrf.mxu0
    %773 = vdwg.mxu0
    %774 = vmatprep.subr.bf16.mxu0 %v571
    %775 = vmatpush1.bf16.msra.mxu0 %v570
    %776 = vmatprep.subr.bf16.mxu0 %v569
    %777 = vmatpush1.bf16.msra.mxu0 %v568
    %778 = vmatprep.subr.bf16.mxu0 %v567
    %779 = vmatpush1.bf16.msra.mxu0 %v566
    %780 = vmatprep.subr.bf16.mxu0 %v565
    %781 = vmatpush1.bf16.msra.mxu0 %v564
    %782 = vmatprep.subr.bf16.mxu0 %v563
    %783 = vmatpush1.bf16.msra.mxu0 %v562
    %784 = vmatprep.subr.bf16.mxu0 %v561
    %785 = vmatpush1.bf16.msra.mxu0 %v560
    %786 = vmatprep.subr.bf16.mxu0 %v559
    %787 = vmatpush1.bf16.msra.mxu0 %v558
    %788 = vmatprep.subr.bf16.mxu0 %v557
    %789 = vmatpush1.bf16.msra.mxu0 %v556
    %790 = vmatprep.subr.bf16.mxu0 %v587
    %791 = vmatpush2.bf16.msra.mxu0 %v586
    %792 = vmatprep.subr.bf16.mxu0 %v585
    %793 = vmatpush2.bf16.msra.mxu0 %v584
    %794 = vmatprep.subr.bf16.mxu0 %v583
    %795 = vmatpush2.bf16.msra.mxu0 %v582
    %796 = vmatprep.subr.bf16.mxu0 %v581
    %797 = vmatpush2.bf16.msra.mxu0 %v580
    %798 = vmatprep.subr.bf16.mxu0 %v579
    %799 = vmatpush2.bf16.msra.mxu0 %v578
    %800 = vmatprep.subr.bf16.mxu0 %v577
    %801 = vmatpush2.bf16.msra.mxu0 %v576
    %802 = vmatprep.subr.bf16.mxu0 %v575
    %803 = vmatpush2.bf16.msra.mxu0 %v574
    %804 = vmatprep.subr.bf16.mxu0 %v573
    %805 = vmatpush2.bf16.msra.mxu0 %v572
    %806 = vmatprep.mubr.bf16.mxu0 %v86
    %807 = vmatmul.mubr.bf16.gmra.mxu0 %v85
    %v808 = vpop.f32.mrf.mxu0
    %v809 = vadd.f32 %v768, %v808
    %v810 = vpop.f32.mrf.mxu0
    %v811 = vadd.f32 %v770, %v810
    %v812 = vpop.f32.mrf.mxu0
    %v813 = vpop.f32.mrf.mxu0
    %814 = vdwg.mxu0
    %815 = vmatprep.subr.bf16.mxu0 0
    %816 = vmatpush1.bf16.msra.mxu0 0
    %817 = vmatprep.subr.bf16.mxu0 0
    %818 = vmatpush1.bf16.msra.mxu0 0
    %819 = vmatprep.subr.bf16.mxu0 0
    %820 = vmatpush1.bf16.msra.mxu0 0
    %821 = vmatprep.subr.bf16.mxu0 0
    %822 = vmatpush1.bf16.msra.mxu0 0
    %823 = vmatprep.subr.bf16.mxu0 0
    %824 = vmatpush1.bf16.msra.mxu0 0
    %825 = vmatprep.subr.bf16.mxu0 0
    %826 = vmatpush1.bf16.msra.mxu0 0
    %827 = vmatprep.subr.bf16.mxu0 0
    %828 = vmatpush1.bf16.msra.mxu0 0
    %829 = vmatprep.subr.bf16.mxu0 %v589
    %830 = vmatpush1.bf16.msra.mxu0 %v588
    %831 = vmatprep.subr.bf16.mxu0 0
    %832 = vmatpush2.bf16.msra.mxu0 0
    %833 = vmatprep.subr.bf16.mxu0 0
    %834 = vmatpush2.bf16.msra.mxu0 0
    %835 = vmatprep.subr.bf16.mxu0 0
    %836 = vmatpush2.bf16.msra.mxu0 0
    %837 = vmatprep.subr.bf16.mxu0 0
    %838 = vmatpush2.bf16.msra.mxu0 0
    %839 = vmatprep.subr.bf16.mxu0 0
    %840 = vmatpush2.bf16.msra.mxu0 0
    %841 = vmatprep.subr.bf16.mxu0 0
    %842 = vmatpush2.bf16.msra.mxu0 0
    %843 = vmatprep.subr.bf16.mxu0 0
    %844 = vmatpush2.bf16.msra.mxu0 0
    %845 = vmatprep.subr.bf16.mxu0 0
    %846 = vmatpush2.bf16.msra.mxu0 0
    %847 = vmatprep.mubr.bf16.mxu0 0
    %848 = vmatmul.mubr.bf16.gmra.mxu0 %v690
    %v849 = vpop.f32.mrf.mxu0
    %v850 = vadd.f32 %v809, %v849
    %v851 = vpop.f32.mrf.mxu0
    %v852 = vadd.f32 %v811, %v851
    %v853 = vpop.f32.mrf.mxu0
    %v854 = vpop.f32.mrf.mxu0
    %855 = vdwg.mxu0
    %v856 = vmax.f32 %v850, 0.0
    %v857 = vmax.f32 %v852, 0.0
    %v858 = vpack.c.bf16 %v856, %v856
    %v859 = vpack.c.bf16 %v857, %v857
    %v860 = vld [vmem:[#allocation2] sm:$0xf]
    %v861 = vld [vmem:[#allocation2 + $0x4] sm:$0xf]
    %v862 = vld [vmem:[#allocation2 + $0x8] sm:$0xf]
    %v863 = vld [vmem:[#allocation2 + $0xc] sm:$0xf]
    %v864 = vld [vmem:[#allocation2 + $0x10] sm:$0xf]
    %v865 = vld [vmem:[#allocation2 + $0x14] sm:$0xf]
    %v866 = vld [vmem:[#allocation2 + $0x18] sm:$0xf]
    %v867 = vld [vmem:[#allocation2 + $0x1c] sm:$0xf]
    %v868 = vld [vmem:[#allocation2 + $0x20] sm:$0xf]
    %v869 = vld [vmem:[#allocation2 + $0x24] sm:$0xf]
    %v870 = vld [vmem:[#allocation2 + $0x28] sm:$0xf]
    %v871 = vld [vmem:[#allocation2 + $0x2c] sm:$0xf]
    %v872 = vld [vmem:[#allocation2 + $0x30] sm:$0xf]
    %v873 = vld [vmem:[#allocation2 + $0x34] sm:$0xf]
    %v874 = vld [vmem:[#allocation2 + $0x38] sm:$0xf]
    %v875 = vld [vmem:[#allocation2 + $0x3c] sm:$0xf]
    %v876 = vld [vmem:[#allocation2 + $0x40] sm:$0xf]
    %v877 = vld [vmem:[#allocation2 + $0x44] sm:$0xf]
    %v878 = vld [vmem:[#allocation2 + $0x48] sm:$0xf]
    %v879 = vld [vmem:[#allocation2 + $0x4c] sm:$0xf]
    %v880 = vld [vmem:[#allocation2 + $0x50] sm:$0xf]
    %v881 = vld [vmem:[#allocation2 + $0x54] sm:$0xf]
    %v882 = vld [vmem:[#allocation2 + $0x58] sm:$0xf]
    %v883 = vld [vmem:[#allocation2 + $0x5c] sm:$0xf]
    %v884 = vld [vmem:[#allocation2 + $0x60] sm:$0xf]
    %v885 = vld [vmem:[#allocation2 + $0x64] sm:$0xf]
    %v886 = vld [vmem:[#allocation2 + $0x68] sm:$0xf]
    %v887 = vld [vmem:[#allocation2 + $0x6c] sm:$0xf]
    %v888 = vld [vmem:[#allocation2 + $0x70] sm:$0xf]
    %v889 = vld [vmem:[#allocation2 + $0x74] sm:$0xf]
    %v890 = vld [vmem:[#allocation2 + $0x78] sm:$0xf]
    %v891 = vld [vmem:[#allocation2 + $0x7c] sm:$0xf]
    %v892 = vld [vmem:[%s4] sm:$0x1]
    %v894 = vlaneseq
    %v895 = vshrl.u32 %v894, 7
    %v896 = vsub.s32 0, %v895
    %v897 = vrot.slane %v892, %v896
    %v931 = vunpack.c.l.b16 %v860
    %v932 = vunpack.c.l.b16 %v861
    %v933 = vunpack.c.l.b16 %v862
    %v934 = vunpack.c.l.b16 %v863
    %v935 = vunpack.c.l.b16 %v864
    %v936 = vunpack.c.l.b16 %v865
    %v937 = vunpack.c.l.b16 %v866
    %v938 = vunpack.c.l.b16 %v867
    %v939 = vunpack.c.l.b16 %v868
    %v940 = vunpack.c.l.b16 %v869
    %v941 = vunpack.c.l.b16 %v870
    %v942 = vunpack.c.l.b16 %v871
    %v943 = vunpack.c.l.b16 %v872
    %v944 = vunpack.c.l.b16 %v873
    %v945 = vunpack.c.l.b16 %v874
    %v946 = vunpack.c.l.b16 %v875
    %v947 = vunpack.c.l.b16 %v876
    %v948 = vunpack.c.l.b16 %v877
    %v949 = vunpack.c.l.b16 %v878
    %v950 = vunpack.c.l.b16 %v879
    %v951 = vunpack.c.l.b16 %v880
    %v952 = vunpack.c.l.b16 %v881
    %v953 = vunpack.c.l.b16 %v882
    %v954 = vunpack.c.l.b16 %v883
    %v955 = vunpack.c.l.b16 %v884
    %v956 = vunpack.c.l.b16 %v885
    %v957 = vunpack.c.l.b16 %v886
    %v958 = vunpack.c.l.b16 %v887
    %v959 = vunpack.c.l.b16 %v888
    %v960 = vunpack.c.l.b16 %v889
    %v961 = vunpack.c.l.b16 %v890
    %v962 = vunpack.c.l.b16 %v891
    %v963 = vpack.c.b16 %v932, %v931
    %v964 = vpack.c.b16 %v934, %v933
    %v965 = vpack.c.b16 %v936, %v935
    %v966 = vpack.c.b16 %v938, %v937
    %v967 = vpack.c.b16 %v940, %v939
    %v968 = vpack.c.b16 %v942, %v941
    %v969 = vpack.c.b16 %v944, %v943
    %v970 = vpack.c.b16 %v946, %v945
    %v971 = vpack.c.b16 %v948, %v947
    %v972 = vpack.c.b16 %v950, %v949
    %v973 = vpack.c.b16 %v952, %v951
    %v974 = vpack.c.b16 %v954, %v953
    %v975 = vpack.c.b16 %v956, %v955
    %v976 = vpack.c.b16 %v958, %v957
    %v977 = vpack.c.b16 %v960, %v959
    %v978 = vpack.c.b16 %v962, %v961
    %995 = vmatprep.subr.bf16.mxu0 0
    %996 = vmatpush1.bf16.msra.mxu0 %v970
    %997 = vmatprep.subr.bf16.mxu0 0
    %998 = vmatpush1.bf16.msra.mxu0 %v969
    %999 = vmatprep.subr.bf16.mxu0 0
    %1000 = vmatpush1.bf16.msra.mxu0 %v968
    %1001 = vmatprep.subr.bf16.mxu0 0
    %1002 = vmatpush1.bf16.msra.mxu0 %v967
    %1003 = vmatprep.subr.bf16.mxu0 0
    %1004 = vmatpush1.bf16.msra.mxu0 %v966
    %1005 = vmatprep.subr.bf16.mxu0 0
    %1006 = vmatpush1.bf16.msra.mxu0 %v965
    %1007 = vmatprep.subr.bf16.mxu0 0
    %1008 = vmatpush1.bf16.msra.mxu0 %v964
    %1009 = vmatprep.subr.bf16.mxu0 0
    %1010 = vmatpush1.bf16.msra.mxu0 %v963
    %1011 = vmatprep.subr.bf16.mxu0 0
    %1012 = vmatpush2.bf16.msra.mxu0 %v978
    %1013 = vmatprep.subr.bf16.mxu0 0
    %1014 = vmatpush2.bf16.msra.mxu0 %v977
    %1015 = vmatprep.subr.bf16.mxu0 0
    %1016 = vmatpush2.bf16.msra.mxu0 %v976
    %1017 = vmatprep.subr.bf16.mxu0 0
    %1018 = vmatpush2.bf16.msra.mxu0 %v975
    %1019 = vmatprep.subr.bf16.mxu0 0
    %1020 = vmatpush2.bf16.msra.mxu0 %v974
    %1021 = vmatprep.subr.bf16.mxu0 0
    %1022 = vmatpush2.bf16.msra.mxu0 %v973
    %1023 = vmatprep.subr.bf16.mxu0 0
    %1024 = vmatpush2.bf16.msra.mxu0 %v972
    %1025 = vmatprep.subr.bf16.mxu0 0
    %1026 = vmatpush2.bf16.msra.mxu0 %v971
    %1027 = vmatprep.mubr.bf16.mxu0 %v859
    %1028 = vmatmul.mubr.bf16.gmra.mxu0 %v858
    %v1029 = vpop.f32.mrf.mxu0
    %v1030 = vadd.f32 %v897, %v1029
    %v1031 = vpop.f32.mrf.mxu0
    %v1032 = vpop.f32.mrf.mxu0
    %v1033 = vpop.f32.mrf.mxu0
    %1034 = vdwg.mxu0
    %v1035 = vmax.f32 %v1030, 0.0
    %v1036 = vpack.c.bf16 %v1035, %v1035
    %v1037 = vld [vmem:[#allocation4] sm:$0xf]
    %v1038 = vld [vmem:[#allocation4 + $0x4] sm:$0xf]
    %v1039 = vld [vmem:[#allocation4 + $0x8] sm:$0xf]
    %v1040 = vld [vmem:[#allocation4 + $0xc] sm:$0xf]
    %v1041 = vld [vmem:[#allocation4 + $0x10] sm:$0xf]
    %v1042 = vld [vmem:[#allocation4 + $0x14] sm:$0xf]
    %v1043 = vld [vmem:[#allocation4 + $0x18] sm:$0xf]
    %v1044 = vld [vmem:[#allocation4 + $0x1c] sm:$0xf]
    %v1045 = vld [vmem:[#allocation4 + $0x20] sm:$0xf]
    %v1046 = vld [vmem:[#allocation4 + $0x24] sm:$0xf]
    %v1047 = vld [vmem:[#allocation4 + $0x28] sm:$0xf]
    %v1048 = vld [vmem:[#allocation4 + $0x2c] sm:$0xf]
    %v1049 = vld [vmem:[#allocation4 + $0x30] sm:$0xf]
    %v1050 = vld [vmem:[#allocation4 + $0x34] sm:$0xf]
    %v1051 = vld [vmem:[#allocation4 + $0x38] sm:$0xf]
    %v1052 = vld [vmem:[#allocation4 + $0x3c] sm:$0xf]
    %v1053 = vld [vmem:[%s6] sm:$0x1]
    %v1055 = vlaneseq
    %v1056 = vshrl.u32 %v1055, 7
    %v1057 = vsub.s32 0, %v1056
    %v1058 = vrot.slane %v1053, %v1057
    %v1076 = vunpack.c.l.b16 %v1037
    %v1077 = vunpack.c.l.b16 %v1038
    %v1078 = vunpack.c.l.b16 %v1039
    %v1079 = vunpack.c.l.b16 %v1040
    %v1080 = vunpack.c.l.b16 %v1041
    %v1081 = vunpack.c.l.b16 %v1042
    %v1082 = vunpack.c.l.b16 %v1043
    %v1083 = vunpack.c.l.b16 %v1044
    %v1084 = vunpack.c.l.b16 %v1045
    %v1085 = vunpack.c.l.b16 %v1046
    %v1086 = vunpack.c.l.b16 %v1047
    %v1087 = vunpack.c.l.b16 %v1048
    %v1088 = vunpack.c.l.b16 %v1049
    %v1089 = vunpack.c.l.b16 %v1050
    %v1090 = vunpack.c.l.b16 %v1051
    %v1091 = vunpack.c.l.b16 %v1052
    %v1092 = vpack.c.b16 %v1077, %v1076
    %v1093 = vpack.c.b16 %v1079, %v1078
    %v1094 = vpack.c.b16 %v1081, %v1080
    %v1095 = vpack.c.b16 %v1083, %v1082
    %v1096 = vpack.c.b16 %v1085, %v1084
    %v1097 = vpack.c.b16 %v1087, %v1086
    %v1098 = vpack.c.b16 %v1089, %v1088
    %v1099 = vpack.c.b16 %v1091, %v1090
    %1108 = vmatprep.subr.bf16.mxu0 0
    %1109 = vmatpush1.bf16.msra.mxu0 %v1099
    %1110 = vmatprep.subr.bf16.mxu0 0
    %1111 = vmatpush1.bf16.msra.mxu0 %v1098
    %1112 = vmatprep.subr.bf16.mxu0 0
    %1113 = vmatpush1.bf16.msra.mxu0 %v1097
    %1114 = vmatprep.subr.bf16.mxu0 0
    %1115 = vmatpush1.bf16.msra.mxu0 %v1096
    %1116 = vmatprep.subr.bf16.mxu0 0
    %1117 = vmatpush1.bf16.msra.mxu0 %v1095
    %1118 = vmatprep.subr.bf16.mxu0 0
    %1119 = vmatpush1.bf16.msra.mxu0 %v1094
    %1120 = vmatprep.subr.bf16.mxu0 0
    %1121 = vmatpush1.bf16.msra.mxu0 %v1093
    %1122 = vmatprep.subr.bf16.mxu0 0
    %1123 = vmatpush1.bf16.msra.mxu0 %v1092
    %1124 = vmatprep.subr.bf16.mxu0 0
    %1125 = vmatpush2.bf16.msra.mxu0 0
    %1126 = vmatprep.subr.bf16.mxu0 0
    %1127 = vmatpush2.bf16.msra.mxu0 0
    %1128 = vmatprep.subr.bf16.mxu0 0
    %1129 = vmatpush2.bf16.msra.mxu0 0
    %1130 = vmatprep.subr.bf16.mxu0 0
    %1131 = vmatpush2.bf16.msra.mxu0 0
    %1132 = vmatprep.subr.bf16.mxu0 0
    %1133 = vmatpush2.bf16.msra.mxu0 0
    %1134 = vmatprep.subr.bf16.mxu0 0
    %1135 = vmatpush2.bf16.msra.mxu0 0
    %1136 = vmatprep.subr.bf16.mxu0 0
    %1137 = vmatpush2.bf16.msra.mxu0 0
    %1138 = vmatprep.subr.bf16.mxu0 0
    %1139 = vmatpush2.bf16.msra.mxu0 0
    %1140 = vmatprep.mubr.bf16.mxu0 0
    %1141 = vmatmul.mubr.bf16.gmra.mxu0 %v1036
    %v1142 = vpop.f32.mrf.mxu0
    %v1143 = vadd.f32 %v1058, %v1142
    %v1144 = vpop.f32.mrf.mxu0
    %v1145 = vpop.f32.mrf.mxu0
    %v1146 = vpop.f32.mrf.mxu0
    %1147 = vdwg.mxu0
    %v1148 = vmax.f32 %v1143, 0.0
    %v1149 = vpack.c.bf16 %v1148, %v1148
    %v1150 = vld [vmem:[#allocation6] sm:$0xf]
    %v1151 = vld [vmem:[#allocation6 + $0x4] sm:$0xf]
    %v1152 = vld [vmem:[#allocation6 + $0x8] sm:$0xf]
    %v1153 = vld [vmem:[#allocation6 + $0xc] sm:$0xf]
    %v1154 = vld [vmem:[#allocation6 + $0x10] sm:$0xf]
    %v1155 = vld [vmem:[#allocation6 + $0x14] sm:$0xf]
    %v1156 = vld [vmem:[#allocation6 + $0x18] sm:$0xf]
    %v1157 = vld [vmem:[#allocation6 + $0x1c] sm:$0xf]
    %v1158 = vld [vmem:[#allocation6 + $0x20] sm:$0xf]
    %v1159 = vld [vmem:[#allocation6 + $0x24] sm:$0xf]
    %v1160 = vld [vmem:[#allocation6 + $0x28] sm:$0xf]
    %v1161 = vld [vmem:[#allocation6 + $0x2c] sm:$0xf]
    %v1162 = vld [vmem:[#allocation6 + $0x30] sm:$0xf]
    %v1163 = vld [vmem:[#allocation6 + $0x34] sm:$0xf]
    %v1164 = vld [vmem:[#allocation6 + $0x38] sm:$0xf]
    %v1165 = vld [vmem:[#allocation6 + $0x3c] sm:$0xf]
    %v1166 = vld [vmem:[%s8] sm:$0x1]
    %v1168 = vlaneseq
    %v1169 = vshrl.u32 %v1168, 7
    %v1170 = vsub.s32 0, %v1169
    %v1171 = vrot.slane %v1166, %v1170
    %v1189 = vunpack.c.l.b16 %v1150
    %v1190 = vunpack.c.l.b16 %v1151
    %v1191 = vunpack.c.l.b16 %v1152
    %v1192 = vunpack.c.l.b16 %v1153
    %v1193 = vunpack.c.l.b16 %v1154
    %v1194 = vunpack.c.l.b16 %v1155
    %v1195 = vunpack.c.l.b16 %v1156
    %v1196 = vunpack.c.l.b16 %v1157
    %v1197 = vunpack.c.l.b16 %v1158
    %v1198 = vunpack.c.l.b16 %v1159
    %v1199 = vunpack.c.l.b16 %v1160
    %v1200 = vunpack.c.l.b16 %v1161
    %v1201 = vunpack.c.l.b16 %v1162
    %v1202 = vunpack.c.l.b16 %v1163
    %v1203 = vunpack.c.l.b16 %v1164
    %v1204 = vunpack.c.l.b16 %v1165
    %v1205 = vpack.c.b16 %v1190, %v1189
    %v1206 = vpack.c.b16 %v1192, %v1191
    %v1207 = vpack.c.b16 %v1194, %v1193
    %v1208 = vpack.c.b16 %v1196, %v1195
    %v1209 = vpack.c.b16 %v1198, %v1197
    %v1210 = vpack.c.b16 %v1200, %v1199
    %v1211 = vpack.c.b16 %v1202, %v1201
    %v1212 = vpack.c.b16 %v1204, %v1203
    %1221 = vmatprep.subr.bf16.mxu0 0
    %1222 = vmatpush1.bf16.msra.mxu0 %v1212
    %1223 = vmatprep.subr.bf16.mxu0 0
    %1224 = vmatpush1.bf16.msra.mxu0 %v1211
    %1225 = vmatprep.subr.bf16.mxu0 0
    %1226 = vmatpush1.bf16.msra.mxu0 %v1210
    %1227 = vmatprep.subr.bf16.mxu0 0
    %1228 = vmatpush1.bf16.msra.mxu0 %v1209
    %1229 = vmatprep.subr.bf16.mxu0 0
    %1230 = vmatpush1.bf16.msra.mxu0 %v1208
    %1231 = vmatprep.subr.bf16.mxu0 0
    %1232 = vmatpush1.bf16.msra.mxu0 %v1207
    %1233 = vmatprep.subr.bf16.mxu0 0
    %1234 = vmatpush1.bf16.msra.mxu0 %v1206
    %1235 = vmatprep.subr.bf16.mxu0 0
    %1236 = vmatpush1.bf16.msra.mxu0 %v1205
    %1237 = vmatprep.subr.bf16.mxu0 0
    %1238 = vmatpush2.bf16.msra.mxu0 0
    %1239 = vmatprep.subr.bf16.mxu0 0
    %1240 = vmatpush2.bf16.msra.mxu0 0
    %1241 = vmatprep.subr.bf16.mxu0 0
    %1242 = vmatpush2.bf16.msra.mxu0 0
    %1243 = vmatprep.subr.bf16.mxu0 0
    %1244 = vmatpush2.bf16.msra.mxu0 0
    %1245 = vmatprep.subr.bf16.mxu0 0
    %1246 = vmatpush2.bf16.msra.mxu0 0
    %1247 = vmatprep.subr.bf16.mxu0 0
    %1248 = vmatpush2.bf16.msra.mxu0 0
    %1249 = vmatprep.subr.bf16.mxu0 0
    %1250 = vmatpush2.bf16.msra.mxu0 0
    %1251 = vmatprep.subr.bf16.mxu0 0
    %1252 = vmatpush2.bf16.msra.mxu0 0
    %1253 = vmatprep.mubr.bf16.mxu0 0
    %1254 = vmatmul.mubr.bf16.gmra.mxu0 %v1149
    %v1255 = vpop.f32.mrf.mxu0
    %v1256 = vadd.f32 %v1171, %v1255
    %v1257 = vpop.f32.mrf.mxu0
    %v1258 = vpop.f32.mrf.mxu0
    %v1259 = vpop.f32.mrf.mxu0
    %1260 = vdwg.mxu0
    %1261 = vmax.xlane.f32.xlu0 %v1256
    %v1262 = vpop.xlane.xlu0 %1261
    %v1263 = vsub.f32 %v1256, %v1262
    %v1264 = vmul.f32 %v1263, 1.442695
    %v1265 = vpow.pop %v1264
    %1266 = vadd.xlane.f32.xlu0 %v1265
    %v1267 = vpop.xlane.xlu0 %1266
    %v1268 = vlog2.pop %v1267
    %v1269 = vmul.f32 %v1268, 0.6931472
    %v1270 = vsub.f32 %v1263, %v1269
    %v1271 = vpack.c.bf16 %v1270, %v1270
    %1272 = vst [vmem:[%s9] sm:$0xf] %v1271
    // Predicated region
    $region50: #{net_forward.1} parent=1 // pred_check
      _
    $region51: #{net_forward.1} parent=1 // pred_check_branch
      %1274 = sbr.rel (0) target = $region53
    $region52: #{net_forward.1} parent=1 // pred_region
      _
    $region53: #{net_forward.1} parent=1 // pred_fallthru
      _
    // Predicated region
    $region54: #{net_forward.1} parent=1 // pred_check
      _
    $region55: #{net_forward.1} parent=1 // pred_check_branch
      %1276 = sbr.rel (0) target = $region57
    $region56: #{net_forward.1} parent=1 // pred_region
      _
    $region57: #{net_forward.1} parent=1 // pred_fallthru
      _
    %1277 = vsyncpa [#allocation3], 1
    %1278 = vsyncpa [#allocation5], 1

</llo_original>
